<compile_context>
chip_gen: v7x
topology: tpu7x:2x2x1
jax: 0.10.0
libtpu: 0.0.40
codegen_flags: <defaults>
</compile_context>

<pallas_src>
import numpy as np
import jax
import jax.numpy as jnp
from jax.experimental import pallas as pl
from jax.experimental.pallas import tpu as pltpu


_LANES = 128                          # lane-dense layout width
_FUSED_MAX_BYTES = 4 * 1024 * 1024    # single-block fast-path threshold
_TILE_TARGET_BYTES = 4 * 1024 * 1024  # per-tile target for the tiled path
_VMEM_LIMIT = 48 * 1024 * 1024        # fits v7x's 64 MiB physical VMEM


def _round_up(x: int, m: int) -> int:
    return (x + m - 1) // m * m


# --------------------------------------------------------------------------
# Fused single-block kernel (small inputs): relu -> sum -> scale, one launch.
# --------------------------------------------------------------------------
def _fused_normalize_kernel(x_ref, o_ref):
    k = jnp.maximum(x_ref[...], 0).astype(jnp.float32)
    s = jnp.sum(k)
    o_ref[...] = (k * (1.0 / s)).astype(o_ref.dtype)


# --------------------------------------------------------------------------
# Pass 1 (tiled path): relu + partial sums into an (8, 128) f32 accumulator.
# reduce_axis is the grid axis over which the accumulator block is resident.
# --------------------------------------------------------------------------
def _make_relu_partial_sum_kernel(reduce_axis: int):
    def kernel(x_ref, acc_ref):
        @pl.when(pl.program_id(reduce_axis) == 0)
        def _init():
            acc_ref[...] = jnp.zeros_like(acc_ref)

        k = jnp.maximum(x_ref[...], 0).astype(jnp.float32)
        # (tr, 128) -> (tr//8, 8, 128) is layout-preserving (native (8,128)
        # tiles); summing over axis 0 is pure VPU vreg adds, no XLU reduce.
        acc_ref[...] = acc_ref[...] + jnp.sum(k.reshape(-1, 8, _LANES), axis=0)

    return kernel


# --------------------------------------------------------------------------
# Pass 2 (tiled path): relu * (1 / sum); reciprocal arrives as an SMEM scalar.
# --------------------------------------------------------------------------
def _relu_scale_kernel(x_ref, inv_ref, o_ref):
    k = jnp.maximum(x_ref[...], 0).astype(jnp.float32)
    o_ref[...] = (k * inv_ref[0]).astype(o_ref.dtype)


@jax.jit
def normalize(k: jax.Array) -> jax.Array:
    """ReLU then normalize by the global sum (matches torch Normalize_Kernel)."""
    orig_shape = k.shape
    dtype = k.dtype
    total = k.size
    itemsize = np.dtype(dtype).itemsize

    # ---------------- fused fast path (fits in VMEM) ------------------------
    if total * itemsize <= _FUSED_MAX_BYTES:
        if total % _LANES == 0:
            x2d = k.reshape(total // _LANES, _LANES)      # free, lane-dense
        elif k.ndim >= 2:
            x2d = k.reshape(-1, orig_shape[-1])           # free 2-D collapse
        else:
            x2d = k.reshape(1, total)
        out2d = pl.pallas_call(
            _fused_normalize_kernel,
            out_shape=jax.ShapeDtypeStruct(x2d.shape, dtype),
            compiler_params=pltpu.CompilerParams(vmem_limit_bytes=_VMEM_LIMIT),
        )(x2d)
        return out2d.reshape(orig_shape)

    # ---------------- tiled two-pass path (large inputs) --------------------
    flat = k.reshape(total)
    rows0 = pl.cdiv(total, _LANES)

    # Tile rows: ~4 MiB contiguous blocks, multiple of 8 sublanes.
    tr = max(8, (_TILE_TARGET_BYTES // (_LANES * itemsize)) // 8 * 8)
    tr = min(tr, _round_up(rows0, 8))
    padded_rows = _round_up(rows0, tr)
    padded_total = padded_rows * _LANES
    n_tiles = padded_rows // tr

    if padded_total != total:
        # Zero padding is sum-safe (relu(0) = 0); only taken when the flat
        # size is not tile-divisible.
        flat = jnp.pad(flat, (0, padded_total - total))
    x2d = flat.reshape(padded_rows, _LANES)

    # ---- pass 1: relu + global partial sums --------------------------------
    use_split = (n_tiles % 2 == 0) and (n_tiles >= 2)
    if use_split:
        # (2, n_tiles//2) grid: outer axis shards across v7x's two TensorCores,
        # each core keeps its own resident (8,128) accumulator block.
        half = n_tiles // 2
        acc = pl.pallas_call(
            _make_relu_partial_sum_kernel(1),
            out_shape=jax.ShapeDtypeStruct((16, _LANES), jnp.float32),
            grid=(2, half),
            in_specs=[pl.BlockSpec((tr, _LANES), lambda c, i: (c * half + i, 0))],
            out_specs=pl.BlockSpec((8, _LANES), lambda c, i: (c, 0)),
            compiler_params=pltpu.CompilerParams(
                dimension_semantics=("parallel", "arbitrary"),
                vmem_limit_bytes=_VMEM_LIMIT,
            ),
            cost_estimate=pl.CostEstimate(
                flops=2 * padded_total,
                transcendentals=0,
                bytes_accessed=padded_total * itemsize + 16 * _LANES * 4,
            ),
        )(x2d)
    else:
        acc = pl.pallas_call(
            _make_relu_partial_sum_kernel(0),
            out_shape=jax.ShapeDtypeStruct((8, _LANES), jnp.float32),
            grid=(n_tiles,),
            in_specs=[pl.BlockSpec((tr, _LANES), lambda i: (i, 0))],
            out_specs=pl.BlockSpec((8, _LANES), lambda i: (0, 0)),
            compiler_params=pltpu.CompilerParams(
                dimension_semantics=("arbitrary",),
                vmem_limit_bytes=_VMEM_LIMIT,
            ),
            cost_estimate=pl.CostEstimate(
                flops=2 * padded_total,
                transcendentals=0,
                bytes_accessed=padded_total * itemsize + 8 * _LANES * 4,
            ),
        )(x2d)

    # Tiny wrapper-side combine: (8|16, 128) partials -> scalar 1/sum (f32).
    inv_sum = jnp.reshape(1.0 / jnp.sum(acc), (1,)).astype(jnp.float32)

    # ---- pass 2: relu * (1 / sum) -------------------------------------------
    out2d = pl.pallas_call(
        _relu_scale_kernel,
        out_shape=jax.ShapeDtypeStruct((padded_rows, _LANES), dtype),
        grid=(n_tiles,),
        in_specs=[
            pl.BlockSpec((tr, _LANES), lambda i: (i, 0)),
            pl.BlockSpec(memory_space=pltpu.MemorySpace.SMEM),  # scalar 1/sum
        ],
        out_specs=pl.BlockSpec((tr, _LANES), lambda i: (i, 0)),
        compiler_params=pltpu.CompilerParams(
            dimension_semantics=("parallel",),
            vmem_limit_bytes=_VMEM_LIMIT,
        ),
        cost_estimate=pl.CostEstimate(
            flops=2 * padded_total,
            transcendentals=0,
            bytes_accessed=2 * padded_total * itemsize + 4,
        ),
    )(x2d, inv_sum)

    out = out2d.reshape(padded_total)
    if padded_total != total:
        out = out[:total]
    return out.reshape(orig_shape)


if __name__ == "__main__":
    keys = jax.random.split(jax.random.PRNGKey(0), 3)

    def reference(x):
        r = jnp.maximum(x, 0.0)
        return r / jnp.sum(r)

    # 1) Small conv-kernel-shaped input -> fused single-block path.
    x_small = jax.random.normal(keys[0], (2, 4, 16, 16), dtype=jnp.float32)
    out_small = jax.block_until_ready(normalize(x_small))
    assert out_small.shape == x_small.shape and out_small.dtype == x_small.dtype
    assert jnp.allclose(out_small, reference(x_small), rtol=1e-5, atol=1e-7)
    assert jnp.allclose(jnp.sum(out_small), 1.0, atol=1e-5)

    # 2) Larger input (8 MiB, even tile count) -> tiled path, dual-core pass 1.
    x_big = jax.random.normal(keys[1], (8, 2, 1024, 128), dtype=jnp.float32)
    out_big = jax.block_until_ready(normalize(x_big))
    assert out_big.shape == x_big.shape and out_big.dtype == x_big.dtype
    assert jnp.allclose(out_big, reference(x_big), rtol=1e-4, atol=1e-9)
    assert jnp.allclose(jnp.sum(out_big), 1.0, atol=1e-2)

    # 3) Odd-sized input (12 MiB, not tile-divisible) -> tiled path with
    #    padding and the single-axis ("arbitrary") pass-1 variant.
    x_odd = jax.random.normal(keys[2], (1532, 2053), dtype=jnp.float32)
    out_odd = jax.block_until_ready(normalize(x_odd))
    assert out_odd.shape == x_odd.shape and out_odd.dtype == x_odd.dtype
    assert jnp.allclose(out_odd, reference(x_odd), rtol=1e-4, atol=1e-9)
    assert jnp.allclose(jnp.sum(out_odd), 1.0, atol=1e-2)

    print("KERNEL_OK")
</pallas_src>

<mosaic_0001>
module attributes {stable_mosaic.version = 11 : i64} {
  func.func @_fused_normalize_kernel(%arg0: memref<16x128xf32, #tpu.memory_space<vmem>>, %arg1: memref<16x128xf32, #tpu.memory_space<vmem>>) attributes {dimension_semantics = [], scalar_prefetch = 0 : i64, scratch_operands = 0 : i64, tpu.core_type = #tpu.core_type<tc>} {
    %c0 = arith.constant 0 : index
    %c0_0 = arith.constant 0 : index
    %0 = vector.load %arg0[%c0, %c0_0] : memref<16x128xf32, #tpu.memory_space<vmem>>, vector<16x128xf32>
    %cst = arith.constant 0.000000e+00 : f32
    %1 = vector.broadcast %cst : f32 to vector<16x128xf32>
    %2 = arith.maximumf %0, %1 : vector<16x128xf32>
    %3 = vector.shape_cast %2 : vector<16x128xf32> to vector<1x16x128xf32>
    %cst_1 = arith.constant dense<0.000000e+00> : vector<1xf32>
    %4 = vector.multi_reduction <add>, %3, %cst_1 [1, 2] : vector<1x16x128xf32> to vector<1xf32>
    %5 = vector.shape_cast %4 : vector<1xf32> to vector<1x1x1xf32>
    %6 = vector.extract %5[0, 0, 0] : f32 from vector<1x1x1xf32>
    %cst_2 = arith.constant 1.000000e+00 : f32
    %7 = arith.divf %cst_2, %6 : f32
    %8 = vector.broadcast %7 : f32 to vector<16x128xf32>
    %9 = arith.mulf %2, %8 : vector<16x128xf32>
    %c0_3 = arith.constant 0 : index
    %c0_4 = arith.constant 0 : index
    %10 = vector.load %arg1[%c0_3, %c0_4] : memref<16x128xf32, #tpu.memory_space<vmem>>, vector<16x128xf32>
    tpu.vector_store %arg1[%c0_3, %c0_4], %9 {strides = array<i32>} : memref<16x128xf32, #tpu.memory_space<vmem>>, vector<16x128xf32>,
    return
  }
}

</mosaic_0001>

<llo_original>
// kernel: normalize.1
$region0: #{normalize.1}
  #allocation0 [shape = 'u32[]', space=smem, size = 0x4, offset = 0x4, fixed_abs, tag = 'smem constant byte address 0x4 - core index']
  #allocation1 [shape = 'u32[144,128]{1,0:T(1,128)}', space=vmem, size = 0x12000, scoped, tag = 'internal scratch']
  %s0 = inlined_call_operand.vmem [shape: f32[16,128], index: 0, kind: input, shape index: {}]
  %s1 = inlined_call_operand.vmem [shape: f32[16,128], index: 1, kind: output, shape index: {}]
  %s2 = sld [smem:[#allocation0]]
  $region14: #{normalize.1} parent=0
    _
  %s4 = ssub.s32 1, %s2
  %s5 = scalar_select 0, %s4, %s2
  // Predicated region
  $region2: #{normalize.1} parent=0 // pred_check
    _
  $region3: #{normalize.1} parent=0 // pred_check_branch
    %7 = sbr.rel (0) target = $region5
  $region4: #{normalize.1} parent=0 // pred_region
    _
  $region5: #{normalize.1} parent=0 // pred_fallthru
    _
  %v8 = vld [vmem:[%s0] sm:$0xff]
  %v9 = vld [vmem:[%s0 + $0x8] sm:$0xff]
  %v10 = vmax.f32 %v8, 0.0
  %v11 = vmax.f32 %v9, 0.0
  %v12 = vadd.f32 %v10, %v11
  %13 = vadd.xlane.f32.xlu0 %v12
  %v14 = vpop.xlane.xlu0 %13
  %v15 = vrot.slane %v14, 4
  %v16 = vadd.f32 %v14, %v15
  %v17 = vrot.slane %v16, 2
  %v18 = vadd.f32 %v16, %v17
  %v19 = vrot.slane %v18, 1
  %v20 = vadd.f32 %v18, %v19
  %s21 = vtos %v20
  %v22 = vstv %s21
  %v23 = vrcp.pop %v22
  %s24 = vtos %v23
  %v25 = vstv %s24
  %v26 = vmul.f32 %v10, %v25
  %v27 = vmul.f32 %v11, %v25
  %28 = vst [vmem:[%s1] sm:$0xff] %v26
  %29 = vst [vmem:[%s1 + $0x8] sm:$0xff] %v27
  // Predicated region
  $region6: #{normalize.1} parent=0 // pred_check
    _
  $region7: #{normalize.1} parent=0 // pred_check_branch
    %31 = sbr.rel (0) target = $region9
  $region8: #{normalize.1} parent=0 // pred_region
    _
  $region9: #{normalize.1} parent=0 // pred_fallthru
    _
  // Predicated region
  $region10: #{normalize.1} parent=0 // pred_check
    _
  $region11: #{normalize.1} parent=0 // pred_check_branch
    %33 = sbr.rel (0) target = $region13
  $region12: #{normalize.1} parent=0 // pred_region
    _
  $region13: #{normalize.1} parent=0 // pred_fallthru
    _

</llo_original>
